<compile_context>
chip_gen: v7x
topology: tpu7x:2x2x1
jax: 0.10.0
libtpu: 0.0.40
codegen_flags: <defaults>
</compile_context>

<pallas_src>
import jax
import jax.numpy as jnp
from jax.experimental import pallas as pl
from jax.experimental.pallas import tpu as pltpu


def _round_up(a, b):
    return (a + b - 1) // b * b


def _choose_tile_n(n_nodes, row_bytes, requested=None,
                   target_bytes=2 << 20, max_bytes=4 << 20):
    """Node-tile rows: ~target_bytes per x-tile DMA, multiple of 512 when possible."""
    if requested is None:
        tile = _round_up(max(target_bytes // max(row_bytes, 1), 1), 512)
        tile = max(tile, 512)
        while tile > 128 and tile * row_bytes > max_bytes:
            tile -= 128
    else:
        tile = max(int(requested), 8)
    n_ceil = _round_up(max(n_nodes, 1), 8)
    if n_ceil <= tile:
        return n_ceil                 # single tile: block == full (padded) extent
    return _round_up(tile, 128)       # multi-tile: lane-aligned batch-id blocks


def _make_pool_kernel(n_nodes, tile_n, kps, compute_dtype, needs_mask):
    """Per step: acc[g, :] += sum of this tile's x rows belonging to graph g."""

    def kernel(batch_ref, x_ref, partial_ref, acc_ref):
        c = pl.program_id(0)          # node-range split ("parallel": v7x 2 TCs)
        k = pl.program_id(1)          # node tiles within the split ("arbitrary")

        @pl.when(k == 0)
        def _init():
            acc_ref[...] = jnp.zeros_like(acc_ref)

        g_pad = acc_ref.shape[0]

        # One-hot pooling tile rebuilt in-kernel: [g_pad, tile_n].
        # Padded / out-of-range nodes carry batch id -1 -> all-zero column.
        seg = batch_ref[...]                                        # (1, tile_n)
        row = jax.lax.broadcasted_iota(jnp.int32, (g_pad, tile_n), 0)
        onehot = (row == seg).astype(compute_dtype)

        x_tile = x_ref[...]
        if needs_mask:
            # Zero rows past n_nodes: edge-block OOB reads are undefined, and a
            # NaN/Inf there would poison the accumulator even through a 0 weight.
            node0 = (c * kps + k) * tile_n
            nid = node0 + jax.lax.broadcasted_iota(jnp.int32, (tile_n, 1), 0)
            x_tile = jnp.where(nid < n_nodes, x_tile, 0)

        # global_add_pool partial sum on the MXU, f32 accumulation in VMEM.
        acc_ref[...] += jnp.dot(onehot, x_tile.astype(compute_dtype),
                                preferred_element_type=jnp.float32)

        @pl.when(k == pl.num_programs(1) - 1)
        def _flush():
            partial_ref[...] = acc_ref[...]

    return kernel


def _make_head_kernel(num_classes):
    """Combine per-split partial sums, then Linear + softmax (tiny, all f32)."""

    def kernel(partial_ref, w_ref, b_ref, logits_ref, probs_ref):
        pooled = jnp.sum(partial_ref[...], axis=0)                  # (g_pad, F) f32
        logits = jnp.dot(pooled, w_ref[...],
                         preferred_element_type=jnp.float32) + b_ref[...]
        logits_ref[...] = logits

        # Softmax over the real classes only (padded lanes masked out).
        col = jax.lax.broadcasted_iota(jnp.int32, logits.shape, 1)
        masked = jnp.where(col < num_classes, logits, -1e30)
        m = jnp.max(masked, axis=-1, keepdims=True)
        e = jnp.exp(masked - m)
        denom = jnp.sum(e, axis=-1, keepdims=True)
        # EUP approx reciprocal: each probs row sums to 1 only to ~1e-3.
        probs_ref[...] = e * pl.reciprocal(denom, approx=True)

    return kernel


def gcn_forward(x, edge_index, batch, weight, bias, num_graphs=None, *,
                tile_n=None, node_splits=2, compute_dtype=jnp.bfloat16):
    """Pallas implementation of GCN.forward(x, edge_index, batch).

    x:          [N, F] float node features (streamed in native dtype)
    edge_index: unused by this module's forward (kept for signature parity)
    batch:      [N] int32 graph id per node (None -> single graph)
    weight:     [C, F] Linear weight (PyTorch convention); bias: [C]
    Returns (logits[G, C], probs[G, C]) in float32.
    """
    del edge_index  # not used by the module's forward
    n_nodes, in_feat = x.shape
    num_classes = weight.shape[0]

    if batch is None:
        batch = jnp.zeros((n_nodes,), dtype=jnp.int32)
        num_graphs = 1
    assert num_graphs is not None

    g_pad = _round_up(max(num_graphs, 1), 8)      # sublane-aligned graph rows
    c_pad = _round_up(num_classes, 128)           # lane-dense logits / probs

    x_itemsize = jnp.dtype(x.dtype).itemsize
    tile_n = _choose_tile_n(n_nodes, in_feat * x_itemsize, tile_n)
    num_k = (n_nodes + tile_n - 1) // tile_n      # real node tiles
    n_split = node_splits if num_k >= 2 else 1    # v7x: one split per TensorCore
    kps = (num_k + n_split - 1) // n_split        # tiles per split
    n_pad = n_split * kps * tile_n                # padded node count (batch ids only)
    needs_mask = n_pad != n_nodes

    # Only O(N * 4B) of host-side padding; x itself is passed through untouched.
    batch_p = jnp.full((1, n_pad), -1, jnp.int32).at[0, :n_nodes].set(
        batch.astype(jnp.int32))
    w_p = jnp.zeros((in_feat, c_pad), jnp.float32).at[:, :num_classes].set(
        weight.T.astype(jnp.float32))
    b_p = jnp.zeros((1, c_pad), jnp.float32).at[0, :num_classes].set(
        bias.astype(jnp.float32))

    # ---------------- pooling kernel (HBM-bound x stream) ----------------
    x_tile_bytes = tile_n * in_feat * x_itemsize
    vmem_bytes = (4 * x_tile_bytes                 # x double-buffer + mask/cast temps
                  + 2 * tile_n * 4                 # batch-id double-buffer
                  + 3 * g_pad * tile_n * 4         # iota / one-hot temporaries
                  + 4 * g_pad * in_feat * 4        # acc scratch + partial-out buffers
                  + (2 << 20))                     # headroom
    vmem_limit = int(min(30 << 20, max(vmem_bytes, 16 << 20)))

    pool_kernel = _make_pool_kernel(n_nodes, tile_n, kps, compute_dtype,
                                    needs_mask)

    def batch_map(c, k):
        return (0, c * kps + k)

    def x_map(c, k):
        # Clamp so a phantom tile (odd tile count split over 2 cores) re-reads
        # the last real tile instead of issuing a fully out-of-bounds DMA; its
        # rows are discarded by the node mask / -1 batch ids.
        return (jnp.minimum(c * kps + k, num_k - 1), 0)

    partial = pl.pallas_call(
        pool_kernel,
        out_shape=jax.ShapeDtypeStruct((n_split, g_pad, in_feat), jnp.float32),
        grid_spec=pltpu.PrefetchScalarGridSpec(
            num_scalar_prefetch=0,
            grid=(n_split, kps),
            in_specs=[
                pl.BlockSpec((1, tile_n), batch_map),            # batch ids
                # TODO(synk): add pipeline_mode=pl.Buffered(3) on x if profiles
                # show the first/last tile DMA still exposed.
                pl.BlockSpec((tile_n, in_feat), x_map),          # x tile (native dtype)
            ],
            out_specs=pl.BlockSpec((None, g_pad, in_feat),
                                   lambda c, k: (c, 0, 0)),
            scratch_shapes=[pltpu.VMEM((g_pad, in_feat), jnp.float32)],
        ),
        compiler_params=pltpu.CompilerParams(
            dimension_semantics=("parallel", "arbitrary"),
            vmem_limit_bytes=vmem_limit),
        cost_estimate=pl.CostEstimate(
            flops=int(2 * g_pad * n_pad * in_feat),
            transcendentals=0,
            bytes_accessed=int(n_nodes * in_feat * x_itemsize + n_pad * 4
                               + n_split * g_pad * in_feat * 4)),
    )(batch_p, x)

    # ------------- combine + Linear + softmax (tiny, all f32) -------------
    head_kernel = _make_head_kernel(num_classes)
    logits_p, probs_p = pl.pallas_call(
        head_kernel,
        out_shape=(
            jax.ShapeDtypeStruct((g_pad, c_pad), jnp.float32),
            jax.ShapeDtypeStruct((g_pad, c_pad), jnp.float32),
        ),
    )(partial, w_p, b_p)

    # TODO(synk): tile the graph dimension (G-blocking) if num_graphs grows past
    # a few hundred; the (g_pad, tile_n) one-hot build then becomes VPU-bound.
    return (logits_p[:num_graphs, :num_classes],
            probs_p[:num_graphs, :num_classes])


if __name__ == "__main__":
    key = jax.random.PRNGKey(0)
    k_x, k_w, k_b, k_x2, k_w2, k_b2 = jax.random.split(key, 6)

    # ---- Test 1: module-sized shapes (8 nodes, 32 features, 2 graphs, 4 classes)
    n_nodes, input_size, num_classes, num_graphs = 8, 32, 4, 2
    x = jax.random.normal(k_x, (n_nodes, input_size), dtype=jnp.float32)
    batch = jnp.array([0, 0, 0, 0, 1, 1, 1, 1], dtype=jnp.int32)
    edge_index = jnp.zeros((2, 4), dtype=jnp.int32)   # unused by forward

    bound = 1.0 / jnp.sqrt(jnp.float32(input_size))
    weight = jax.random.uniform(k_w, (num_classes, input_size),
                                minval=-bound, maxval=bound, dtype=jnp.float32)
    bias = jax.random.uniform(k_b, (num_classes,),
                              minval=-bound, maxval=bound, dtype=jnp.float32)

    pooled_ref = jax.ops.segment_sum(x, batch, num_segments=num_graphs)
    logits_ref = pooled_ref @ weight.T + bias
    probs_ref = jax.nn.softmax(logits_ref, axis=-1)

    # f32 compute path: tight check (probs tolerance covers the approx reciprocal).
    logits32, probs32 = gcn_forward(x, edge_index, batch, weight, bias,
                                    num_graphs, compute_dtype=jnp.float32)
    jax.block_until_ready((logits32, probs32))
    assert logits32.shape == (num_graphs, num_classes)
    assert probs32.shape == (num_graphs, num_classes)
    assert jnp.allclose(logits32, logits_ref, atol=1e-5, rtol=1e-5)
    assert jnp.allclose(probs32, probs_ref, atol=1e-2, rtol=1e-2)

    # Default bf16 MXU feed for the pooling matmul (f32 accumulation, f32 head).
    logits_bf, probs_bf = gcn_forward(x, edge_index, batch, weight, bias,
                                      num_graphs)
    jax.block_until_ready((logits_bf, probs_bf))
    assert logits_bf.shape == (num_graphs, num_classes)
    assert probs_bf.shape == (num_graphs, num_classes)
    assert jnp.allclose(logits_bf, logits_ref, atol=1e-1, rtol=1e-1)
    assert jnp.allclose(probs_bf, probs_ref, atol=5e-2, rtol=5e-2)

    # ---- Test 2: multi-tile / 2-way split / ragged-tail path (forced small tile)
    n2, f2, c2, g2 = 850, 64, 5, 3
    x2 = jax.random.normal(k_x2, (n2, f2), dtype=jnp.float32)
    batch2 = jnp.minimum(jnp.arange(n2) // 300, g2 - 1).astype(jnp.int32)
    bound2 = 1.0 / jnp.sqrt(jnp.float32(f2))
    weight2 = jax.random.uniform(k_w2, (c2, f2), minval=-bound2, maxval=bound2,
                                 dtype=jnp.float32)
    bias2 = jax.random.uniform(k_b2, (c2,), minval=-bound2, maxval=bound2,
                               dtype=jnp.float32)

    pooled2 = jax.ops.segment_sum(x2, batch2, num_segments=g2)
    logits2_ref = pooled2 @ weight2.T + bias2
    probs2_ref = jax.nn.softmax(logits2_ref, axis=-1)

    logits2, probs2 = gcn_forward(x2, None, batch2, weight2, bias2, g2,
                                  tile_n=128, compute_dtype=jnp.float32)
    jax.block_until_ready((logits2, probs2))
    assert logits2.shape == (g2, c2) and probs2.shape == (g2, c2)
    assert jnp.allclose(logits2, logits2_ref, atol=5e-3, rtol=5e-3)
    assert jnp.allclose(probs2, probs2_ref, atol=1e-2, rtol=1e-2)

    print("KERNEL_OK")
</pallas_src>

<mosaic_0001>
module attributes {stable_mosaic.version = 11 : i64} {
  func.func @kernel(%arg0: i32, %arg1: i32, %arg2: memref<1x8xi32, #tpu.memory_space<vmem>>, %arg3: memref<8x32xf32, #tpu.memory_space<vmem>>, %arg4: memref<1x8x32xf32, #tpu.memory_space<vmem>>, %arg5: memref<8x32xf32, #tpu.memory_space<vmem>>) attributes {dimension_semantics = [#tpu.dimension_semantics<parallel>, #tpu.dimension_semantics<arbitrary>], iteration_bounds = array<i64: 1, 1>, scalar_prefetch = 0 : i64, scratch_operands = 1 : i64, tpu.core_type = #tpu.core_type<tc>, window_params = [{transform_indices = @transform_0, window_bounds = array<i64: 1, 8>}, {transform_indices = @transform_1, window_bounds = array<i64: 8, 32>}, {transform_indices = @transform_2, window_bounds = array<i64: 1, 8, 32>}]} {
    %c0_i32 = arith.constant 0 : i32
    %0 = arith.cmpi eq, %arg1, %c0_i32 : i32
    %1 = arith.extui %0 : i1 to i32
    %c0_i32_0 = arith.constant 0 : i32
    %2 = arith.cmpi ne, %1, %c0_i32_0 : i32
    scf.if %2 {
      %cst_10 = arith.constant 0.000000e+00 : f32
      %17 = vector.broadcast %cst_10 : f32 to vector<8x32xf32>
      %c0_11 = arith.constant 0 : index
      %c0_12 = arith.constant 0 : index
      %18 = vector.load %arg5[%c0_11, %c0_12] : memref<8x32xf32, #tpu.memory_space<vmem>>, vector<8x32xf32>
      tpu.vector_store %arg5[%c0_11, %c0_12], %17 {strides = array<i32>} : memref<8x32xf32, #tpu.memory_space<vmem>>, vector<8x32xf32>,
    } else {
    }
    %c0 = arith.constant 0 : index
    %c0_1 = arith.constant 0 : index
    %3 = vector.load %arg2[%c0, %c0_1] : memref<1x8xi32, #tpu.memory_space<vmem>>, vector<1x8xi32>
    %4 = tpu.iota {dimensions = array<i32: 0>} : vector<8x8xi32>
    %5 = vector.broadcast %3 : vector<1x8xi32> to vector<8x8xi32>
    %6 = arith.cmpi eq, %4, %5 : vector<8x8xi32>
    %7 = arith.extui %6 : vector<8x8xi1> to vector<8x8xi32>
    %8 = arith.sitofp %7 : vector<8x8xi32> to vector<8x8xf32>
    %c0_2 = arith.constant 0 : index
    %c0_3 = arith.constant 0 : index
    %9 = vector.load %arg3[%c0_2, %c0_3] : memref<8x32xf32, #tpu.memory_space<vmem>>, vector<8x32xf32>
    %c0_4 = arith.constant 0 : index
    %c0_5 = arith.constant 0 : index
    %10 = vector.load %arg5[%c0_4, %c0_5] : memref<8x32xf32, #tpu.memory_space<vmem>>, vector<8x32xf32>
    %cst = arith.constant dense<0.000000e+00> : vector<8x32xf32>
    %11 = tpu.matmul %8, %9, %cst {dimension_numbers = #tpu.dot_dimension_numbers<[1], [0], [0], [1], [0, 0, 1, 1], [], []>} : vector<8x8xf32>, vector<8x32xf32>, vector<8x32xf32> -> vector<8x32xf32>
    %12 = arith.addf %10, %11 : vector<8x32xf32>
    %c0_6 = arith.constant 0 : index
    %c0_7 = arith.constant 0 : index
    %13 = vector.load %arg5[%c0_6, %c0_7] : memref<8x32xf32, #tpu.memory_space<vmem>>, vector<8x32xf32>
    tpu.vector_store %arg5[%c0_6, %c0_7], %12 {strides = array<i32>} : memref<8x32xf32, #tpu.memory_space<vmem>>, vector<8x32xf32>,
    %c0_i32_8 = arith.constant 0 : i32
    %14 = arith.cmpi eq, %arg1, %c0_i32_8 : i32
    %15 = arith.extui %14 : i1 to i32
    %c0_i32_9 = arith.constant 0 : i32
    %16 = arith.cmpi ne, %15, %c0_i32_9 : i32
    scf.if %16 {
      %c0_10 = arith.constant 0 : index
      %c0_11 = arith.constant 0 : index
      %17 = vector.load %arg5[%c0_10, %c0_11] : memref<8x32xf32, #tpu.memory_space<vmem>>, vector<8x32xf32>
      %c0_12 = arith.constant 0 : index
      %c0_13 = arith.constant 0 : index
      %c0_14 = arith.constant 0 : index
      %18 = vector.load %arg4[%c0_12, %c0_13, %c0_14] : memref<1x8x32xf32, #tpu.memory_space<vmem>>, vector<1x8x32xf32>
      %19 = vector.shape_cast %18 : vector<1x8x32xf32> to vector<8x32xf32>
      %20 = vector.shape_cast %17 : vector<8x32xf32> to vector<1x8x32xf32>
      tpu.vector_store %arg4[%c0_12, %c0_13, %c0_14], %20 {strides = array<i32>} : memref<1x8x32xf32, #tpu.memory_space<vmem>>, vector<1x8x32xf32>,
    } else {
    }
    return
  }
  func.func @transform_0(%arg0: i32, %arg1: i32) -> (i32, i32) {
    %c1_i32 = arith.constant 1 : i32
    %0 = arith.muli %arg0, %c1_i32 : i32
    %1 = arith.addi %0, %arg1 : i32
    %c0_i32 = arith.constant 0 : i32
    %c0_i32_0 = arith.constant 0 : i32
    return %c0_i32, %1 : i32, i32
  }
  func.func @transform_1(%arg0: i32, %arg1: i32) -> (i32, i32) {
    %c1_i32 = arith.constant 1 : i32
    %0 = arith.muli %arg0, %c1_i32 : i32
    %1 = arith.addi %0, %arg1 : i32
    %c0_i32 = arith.constant 0 : i32
    %2 = arith.minsi %1, %c0_i32 : i32
    %c0_i32_0 = arith.constant 0 : i32
    %c0_i32_1 = arith.constant 0 : i32
    return %2, %c0_i32_0 : i32, i32
  }
  func.func @transform_2(%arg0: i32, %arg1: i32) -> (i32, i32, i32) {
    %c0_i32 = arith.constant 0 : i32
    %c0_i32_0 = arith.constant 0 : i32
    %c0_i32_1 = arith.constant 0 : i32
    return %arg0, %c0_i32, %c0_i32_0 : i32, i32, i32
  }
}

</mosaic_0001>

<llo_original>
// kernel: tpu_custom_call.1
$region0: #{tpu_custom_call.1}
  #allocation0 [shape = 'u32[]', space=smem, size = 0x4, offset = 0x4, fixed_abs, tag = 'smem constant byte address 0x4 - core index']
  #allocation1 [shape = 'u32[144,128]{1,0:T(1,128)}', space=vmem, size = 0x12000, scoped, tag = 'internal scratch']
  #allocation2 [shape = 'f32[8,32]{1,0:T(8,128)}', space=vmem, size = 0x1000, scoped, tag = 'scratch operand']
  %s0 = inlined_call_operand.hbm [shape: s32[1,8], index: 0, kind: input, shape index: {}]
  %s1 = inlined_call_operand.hbm [shape: f32[8,32], index: 1, kind: input, shape index: {}]
  %s2 = inlined_call_operand.hbm [shape: f32[1,8,32], index: 2, kind: output, shape index: {}]
  %s3 = sld [smem:[#allocation0]]
  $region34: #{tpu_custom_call.1} parent=0
    _
  %s5 = ssub.s32 1, %s3
  %s6 = scalar_select 0, %s5, %s3
  $region1: #{tpu_custom_call.1} parent=0
    #allocation3 [shape = 'u8[512]{0}', space=vmem, size = 0x400, scoped, tag = 'input window, operand 0, single buffered']
    #allocation4 [shape = 's32[1]{0}', space=sflag, size = 0x4, scoped, tag = 'scoped memory for tpu_custom_call.1']
    #allocation5 [shape = 's32[1]{0}', space=sflag, size = 0x4, scoped, tag = 'scoped memory for tpu_custom_call.1']
    #allocation6 [shape = 'u8[4096]{0}', space=vmem, size = 0x1000, scoped, tag = 'input window, operand 1, single buffered']
    #allocation7 [shape = 's32[1]{0}', space=sflag, size = 0x4, scoped, tag = 'scoped memory for tpu_custom_call.1']
    #allocation8 [shape = 'u8[4096]{0}', space=vmem, size = 0x1000, scoped, tag = 'output window, operand 0, single buffered']
    %7 = vsyncpa [#allocation4], 0
    %8 = vsyncpa [#allocation7], 0
    %9 = vsyncpa [#allocation5], 0
    // Predicated region
    $region2: #{tpu_custom_call.1} parent=1 // pred_check
      _
    $region3: #{tpu_custom_call.1} parent=1 // pred_check_branch
      %11 = sbr.rel (0) target = $region5
    $region4: #{tpu_custom_call.1} parent=1 // pred_region
      %s12 = sadd.s32 0, 0
      %s14 = ssub.s32 16, 16
      %15 = vsyncadd [#allocation4], %s14
      %s16 = smul.addr %s12, 16
      %s17 = scalar_lea.hbm %s0, %s16
      %s19 = sshll.u32 [#allocation3], 4
      %s20 = int_to_ptr.vmem [resolvable:$true] %s19
      %22 = dma.hbm_to_vmem [thread:$0]  %s17, 16, %s20, [#allocation4]
    $region5: #{tpu_custom_call.1} parent=1 // pred_fallthru
      _
    // Predicated region
    $region6: #{tpu_custom_call.1} parent=1 // pred_check
      _
    $region7: #{tpu_custom_call.1} parent=1 // pred_check_branch
      %24 = sbr.rel (0) target = $region9
    $region8: #{tpu_custom_call.1} parent=1 // pred_region
      %s25 = sadd.s32 0, 0
      %p26 = scmp.lt.s32.totalorder %s25, 0
      %s27 = scalar_select %p26, %s25, 0
      %s29 = ssub.s32 128, 128
      %30 = vsyncadd [#allocation7], %s29
      %s31 = smul.addr %s27, 128
      %s32 = scalar_lea.hbm %s1, %s31
      %s34 = sshll.u32 [#allocation6], 4
      %s35 = int_to_ptr.vmem [resolvable:$true] %s34
      %37 = dma.hbm_to_vmem [thread:$0]  %s32, 128, %s35, [#allocation7]
    $region9: #{tpu_custom_call.1} parent=1 // pred_fallthru
      _
    // Predicated region
    $region10: #{tpu_custom_call.1} parent=1 // pred_check
      _
    $region11: #{tpu_custom_call.1} parent=1 // pred_check_branch
      %39 = sbr.rel (0) target = $region13
    $region12: #{tpu_custom_call.1} parent=1 // pred_region
      %40 = dma.done [#allocation4], 16
    $region13: #{tpu_custom_call.1} parent=1 // pred_fallthru
      _
    // Predicated region
    $region14: #{tpu_custom_call.1} parent=1 // pred_check
      _
    $region15: #{tpu_custom_call.1} parent=1 // pred_check_branch
      %42 = sbr.rel (0) target = $region17
    $region16: #{tpu_custom_call.1} parent=1 // pred_region
      %43 = dma.done [#allocation7], 128
    $region17: #{tpu_custom_call.1} parent=1 // pred_fallthru
      _
    %s44 = sadd.s32 0, 0
    %s45 = sadd.s32 0, 0
    %p46 = scmp.lt.s32.totalorder %s45, 0
    %s47 = scalar_select %p46, %s45, 0
    %p48 = scmp.eq.s32.totalorder 0, 0
    // Predicated region
    $region18: #{tpu_custom_call.1} parent=1 // pred_check
      %p49 = pneg %p48
    $region19: #{tpu_custom_call.1} parent=1 // pred_check_branch
      %51 = sbr.rel (%p49) target = $region21
    $region20: #{tpu_custom_call.1} parent=1 // pred_region
      %vm52 = vcmask 261120
      %53 = vst.msk [vmem:[#allocation2] sm:$0xff] %vm52, 0.0
    $region21: #{tpu_custom_call.1} parent=1 // pred_fallthru
      _
    %v54 = vld [vmem:[#allocation3] sm:$0x1]
    %v55 = vlaneseq
    %v56 = vshrl.u32 %v55, 7
    %v57 = vlaneseq
    %v58 = vshrl.u32 %v57, 7
    %v59 = vsub.s32 0, %v58
    %v60 = vrot.slane %v54, %v59
    %vm61 = vcmp.eq.s32.totalorder %v56, %v60
    %v62 = vsel %vm61, 1, 0
    %v63 = vcvt.s32.f32 %v62
    %v64 = vld [vmem:[#allocation6] sm:$0xff]
    %v65 = vld [vmem:[#allocation2] sm:$0xff]
    %vm66 = vcmask 64512
    %v68 = vsel %vm66, %v63, 0
    %70 = vmatprep.subr.mxu0 0.0
    %71 = vmatpush1.msra.mxu0 %v64
    %72 = vmatprep.subr.mxu0 0.0
    %73 = vmatpush1.msra.mxu0 0.0
    %74 = vmatprep.subr.mxu0 0.0
    %75 = vmatpush1.msra.mxu0 0.0
    %76 = vmatprep.subr.mxu0 0.0
    %77 = vmatpush1.msra.mxu0 0.0
    %78 = vmatprep.subr.mxu0 0.0
    %79 = vmatpush1.msra.mxu0 0.0
    %80 = vmatprep.subr.mxu0 0.0
    %81 = vmatpush1.msra.mxu0 0.0
    %82 = vmatprep.subr.mxu0 0.0
    %83 = vmatpush1.msra.mxu0 0.0
    %84 = vmatprep.subr.mxu0 0.0
    %85 = vmatpush1.msra.mxu0 0.0
    %86 = vmatprep.subr.mxu0 0.0
    %87 = vmatpush1.msra.mxu0 0.0
    %88 = vmatprep.subr.mxu0 0.0
    %89 = vmatpush1.msra.mxu0 0.0
    %90 = vmatprep.subr.mxu0 0.0
    %91 = vmatpush1.msra.mxu0 0.0
    %92 = vmatprep.subr.mxu0 0.0
    %93 = vmatpush1.msra.mxu0 0.0
    %94 = vmatprep.subr.mxu0 0.0
    %95 = vmatpush1.msra.mxu0 0.0
    %96 = vmatprep.subr.mxu0 0.0
    %97 = vmatpush1.msra.mxu0 0.0
    %98 = vmatprep.subr.mxu0 0.0
    %99 = vmatpush1.msra.mxu0 0.0
    %100 = vmatprep.subr.mxu0 0.0
    %101 = vmatpush1.msra.mxu0 0.0
    %102 = vmatprep.subr.mxu0 0.0
    %103 = vmatpush1.msra.mxu0 0.0
    %104 = vmatprep.subr.mxu0 0.0
    %105 = vmatpush1.msra.mxu0 0.0
    %106 = vmatprep.subr.mxu0 0.0
    %107 = vmatpush1.msra.mxu0 0.0
    %108 = vmatprep.subr.mxu0 0.0
    %109 = vmatpush1.msra.mxu0 0.0
    %110 = vmatprep.subr.mxu0 0.0
    %111 = vmatpush1.msra.mxu0 0.0
    %112 = vmatprep.subr.mxu0 0.0
    %113 = vmatpush1.msra.mxu0 0.0
    %114 = vmatprep.subr.mxu0 0.0
    %115 = vmatpush1.msra.mxu0 0.0
    %116 = vmatprep.subr.mxu0 0.0
    %117 = vmatpush1.msra.mxu0 0.0
    %118 = vmatprep.subr.mxu0 0.0
    %119 = vmatpush1.msra.mxu0 0.0
    %120 = vmatprep.subr.mxu0 0.0
    %121 = vmatpush1.msra.mxu0 0.0
    %122 = vmatprep.subr.mxu0 0.0
    %123 = vmatpush1.msra.mxu0 0.0
    %124 = vmatprep.subr.mxu0 0.0
    %125 = vmatpush1.msra.mxu0 0.0
    %126 = vmatprep.subr.mxu0 0.0
    %127 = vmatpush1.msra.mxu0 0.0
    %128 = vmatprep.subr.mxu0 0.0
    %129 = vmatpush1.msra.mxu0 0.0
    %130 = vmatprep.subr.mxu0 0.0
    %131 = vmatpush1.msra.mxu0 0.0
    %132 = vmatprep.subr.mxu0 0.0
    %133 = vmatpush1.msra.mxu0 0.0
    %134 = vmatprep.mubr.f32.mxu0 0.0
    %135 = vmatmul.mubr.f32.gmra.mrb[0].mxu0 %v68
    %v136 = vpop.f32.mrb[0].mxu0
    %v137 = vadd.f32 0.0, %v136
    %v138 = vpop.f32.mrb[0].mxu0
    %139 = vdwg.mxu0
    %v140 = vadd.f32 %v65, %v137
    %vm141 = vcmask 261120
    %142 = vst.msk [vmem:[#allocation2] sm:$0xff] %vm141, %v140
    // Predicated region
    $region22: #{tpu_custom_call.1} parent=1 // pred_check
      %p143 = pneg %p48
    $region23: #{tpu_custom_call.1} parent=1 // pred_check_branch
      %145 = sbr.rel (%p143) target = $region25
    $region24: #{tpu_custom_call.1} parent=1 // pred_region
      %v146 = vld [vmem:[#allocation2] sm:$0xff]
      %147 = vst.msk [vmem:[#allocation8] sm:$0xff] %vm141, %v146
    $region25: #{tpu_custom_call.1} parent=1 // pred_fallthru
      _
    // Predicated region
    $region26: #{tpu_custom_call.1} parent=1 // pred_check
      _
    $region27: #{tpu_custom_call.1} parent=1 // pred_check_branch
      %149 = sbr.rel (0) target = $region29
    $region28: #{tpu_custom_call.1} parent=1 // pred_region
      %s151 = ssub.s32 128, 128
      %152 = vsyncadd [#allocation5], %s151
      %s154 = sshll.u32 [#allocation8], 4
      %s155 = int_to_ptr.vmem [resolvable:$true] %s154
      %157 = dma.vmem_to_hbm [thread:$0]  %s155, 128, %s2, [#allocation5]
    $region29: #{tpu_custom_call.1} parent=1 // pred_fallthru
      _
    // Predicated region
    $region30: #{tpu_custom_call.1} parent=1 // pred_check
      _
    $region31: #{tpu_custom_call.1} parent=1 // pred_check_branch
      %159 = sbr.rel (0) target = $region33
    $region32: #{tpu_custom_call.1} parent=1 // pred_region
      %160 = dma.done [#allocation5], 128
    $region33: #{tpu_custom_call.1} parent=1 // pred_fallthru
      _
    %161 = vsyncpa [#allocation4], 1
    %162 = vsyncpa [#allocation7], 1
    %163 = vsyncpa [#allocation5], 1

</llo_original>
